<compile_context>
chip_gen: v6e
topology: v6e:2x2x1
jax: 0.10.0
libtpu: 0.0.40
codegen_flags: <defaults>
</compile_context>

<pallas_src>
import functools
import math

import jax
import jax.numpy as jnp
from jax.experimental import pallas as pl
from jax.experimental.pallas import tpu as pltpu

# NOTE: 1e-40 is subnormal in float32; the TPU VPU flushes subnormals to
# zero, so the lower clamp only matters for inputs <= 0 (where both this
# kernel and a jnp reference on TPU produce +inf).  Kept as-is to match the
# PyTorch module's semantics.
EPSILON = 1e-40

LANE = 128
SUBLANE = 8
MAX_BLOCK_ROWS = 1024   # 1024 x 128 x 4 B = 512 KiB per f32 input buffer.
NUM_CORES = 2           # v7x has 2 TensorCores; harmless elsewhere.


def _gen_loss_kernel(x_ref, out_ref, *, n, block_rows, blocks_per_core):
    """Accumulate sum(-log(clamp(x, eps, 1))) into a per-core (8,128) slab."""
    c = pl.program_id(0)          # core / outer split
    i = pl.program_id(1)          # row-block index within this core's range

    @pl.when(i == 0)
    def _init():
        out_ref[...] = jnp.zeros_like(out_ref)

    x = x_ref[...].astype(jnp.float32)
    loss = -jnp.log(jnp.clip(x, EPSILON, 1.0))

    # Mask out everything past the true element count n.  This covers the
    # (optional) wrapper tail pad, partially-valid edge blocks, and any
    # clamped (duplicated) block reads from an uneven core split.
    logical_block = c * blocks_per_core + i
    row = jax.lax.broadcasted_iota(jnp.int32, (block_rows, LANE), 0)
    lane = jax.lax.broadcasted_iota(jnp.int32, (block_rows, LANE), 1)
    gidx = (logical_block * block_rows + row) * LANE + lane
    loss = jnp.where(gidx < n, loss, 0.0)

    # Fold (block_rows, 128) -> (8, 128) with pure elementwise adds (VPU only;
    # no per-step cross-lane reduce) and accumulate into the resident output.
    folded = loss.reshape(block_rows // SUBLANE, SUBLANE, LANE).sum(axis=0)
    out_ref[...] += folded


def gen_loss(logits_gen):
    """mean(-log(clamp(logits_gen, EPSILON, 1.0))) via a Pallas TPU kernel."""
    n = math.prod(logits_gen.shape)
    assert n > 0

    flat = logits_gen.reshape(-1)   # no dtype cast; kernel upcasts per tile
    tail = (-n) % (SUBLANE * LANE)
    if tail:
        # Ragged sizes only: minimal pad so the (rows, 128) reshape is legal;
        # pad values are masked out inside the kernel.
        flat = jnp.pad(flat, (0, tail))

    rows = flat.shape[0] // LANE    # multiple of SUBLANE by construction
    x2 = flat.reshape(rows, LANE)

    block_rows = min(MAX_BLOCK_ROWS, rows)
    total_blocks = pl.cdiv(rows, block_rows)

    # Shard row-blocks across (up to) 2 TensorCores (v7x megacore win);
    # single-TC chips just run the two grid slices sequentially.
    cores = min(NUM_CORES, total_blocks)
    blocks_per_core = pl.cdiv(total_blocks, cores)

    if cores * blocks_per_core == total_blocks:
        in_index = lambda c, i: (c * blocks_per_core + i, 0)
    else:
        last_block = total_blocks - 1
        # Clamp to a valid block; the duplicated read is zeroed by the
        # in-kernel mask (its logical index maps past n).
        in_index = lambda c, i: (
            jnp.minimum(c * blocks_per_core + i, last_block), 0)

    kernel = functools.partial(
        _gen_loss_kernel,
        n=n, block_rows=block_rows, blocks_per_core=blocks_per_core)

    itemsize = jnp.dtype(logits_gen.dtype).itemsize
    partials = pl.pallas_call(
        kernel,
        out_shape=jax.ShapeDtypeStruct((cores * SUBLANE, LANE), jnp.float32),
        grid_spec=pltpu.PrefetchScalarGridSpec(
            num_scalar_prefetch=0,
            grid=(cores, blocks_per_core),
            in_specs=[pl.BlockSpec((block_rows, LANE), in_index)],
            out_specs=pl.BlockSpec((SUBLANE, LANE), lambda c, i: (c, 0)),
        ),
        compiler_params=pltpu.CompilerParams(
            dimension_semantics=("parallel", "arbitrary")),
        cost_estimate=pl.CostEstimate(
            flops=6 * n,
            transcendentals=n,
            bytes_accessed=n * itemsize + cores * SUBLANE * LANE * 4),
    )(x2)

    # Tiny epilogue: single cross-lane reduce of the (cores*8, 128) partials.
    return jnp.sum(partials) / jnp.float32(n)


def _gen_loss_ref(logits_gen):
    x = jnp.clip(logits_gen.astype(jnp.float32), EPSILON, 1.0)
    return jnp.mean(-jnp.log(x))


if __name__ == "__main__":
    key = jax.random.PRNGKey(0)
    # Discriminator outputs on generated images: probabilities in (0, 1).
    shape = (2, 4, 16, 16)
    logits_gen = jax.random.uniform(key, shape, jnp.float32,
                                    minval=0.01, maxval=0.99)

    out = jax.block_until_ready(gen_loss(logits_gen))
    ref = _gen_loss_ref(logits_gen)
    assert jnp.allclose(out, ref, rtol=1e-4, atol=1e-6), (out, ref)

    # bf16 input: no wrapper-side astype, kernel upcasts per tile.
    x_bf16 = logits_gen.astype(jnp.bfloat16)
    out_bf = jax.block_until_ready(gen_loss(x_bf16))
    ref_bf = _gen_loss_ref(x_bf16.astype(jnp.float32))
    assert jnp.allclose(out_bf, ref_bf, rtol=1e-2, atol=1e-3), (out_bf, ref_bf)

    # Ragged element count: exercises the minimal tail pad + in-kernel mask.
    x_ragged = jax.random.uniform(jax.random.PRNGKey(1), (3, 5, 7, 11),
                                  jnp.float32, minval=0.01, maxval=0.99)
    out_r = jax.block_until_ready(gen_loss(x_ragged))
    ref_r = _gen_loss_ref(x_ragged)
    assert jnp.allclose(out_r, ref_r, rtol=1e-4, atol=1e-6), (out_r, ref_r)

    # Larger input: exercises the 2-core grid split (two 1024-row blocks).
    x_big = jax.random.uniform(jax.random.PRNGKey(2), (4, 16, 64, 64),
                               jnp.float32, minval=0.01, maxval=0.99)
    out_b = jax.block_until_ready(gen_loss(x_big))
    ref_b = _gen_loss_ref(x_big)
    assert jnp.allclose(out_b, ref_b, rtol=1e-4, atol=1e-6), (out_b, ref_b)

    print("KERNEL_OK")
</pallas_src>

<mosaic_0001>
module attributes {stable_mosaic.version = 11 : i64} {
  func.func @_gen_loss_kernel(%arg0: i32, %arg1: i32, %arg2: memref<16x128xf32, #tpu.memory_space<vmem>>, %arg3: memref<8x128xf32, #tpu.memory_space<vmem>>) attributes {dimension_semantics = [#tpu.dimension_semantics<parallel>, #tpu.dimension_semantics<arbitrary>], iteration_bounds = array<i64: 1, 1>, scalar_prefetch = 0 : i64, scratch_operands = 0 : i64, tpu.core_type = #tpu.core_type<tc>, window_params = [{transform_indices = @transform_0, window_bounds = array<i64: 16, 128>}, {transform_indices = @transform_1, window_bounds = array<i64: 8, 128>}]} {
    %c0_i32 = arith.constant 0 : i32
    %0 = arith.cmpi eq, %arg1, %c0_i32 : i32
    %1 = arith.extui %0 : i1 to i32
    %c0_i32_0 = arith.constant 0 : i32
    %2 = arith.cmpi ne, %1, %c0_i32_0 : i32
    scf.if %2 {
      %cst_10 = arith.constant 0.000000e+00 : f32
      %30 = vector.broadcast %cst_10 : f32 to vector<8x128xf32>
      %c0_11 = arith.constant 0 : index
      %c0_12 = arith.constant 0 : index
      %31 = vector.load %arg3[%c0_11, %c0_12] : memref<8x128xf32, #tpu.memory_space<vmem>>, vector<8x128xf32>
      tpu.vector_store %arg3[%c0_11, %c0_12], %30 {strides = array<i32>} : memref<8x128xf32, #tpu.memory_space<vmem>>, vector<8x128xf32>,
    } else {
    }
    %c0 = arith.constant 0 : index
    %c0_1 = arith.constant 0 : index
    %3 = vector.load %arg2[%c0, %c0_1] : memref<16x128xf32, #tpu.memory_space<vmem>>, vector<16x128xf32>
    %cst = arith.constant 9.999940e-41 : f32
    %cst_2 = arith.constant 1.000000e+00 : f32
    %4 = vector.broadcast %cst : f32 to vector<16x128xf32>
    %5 = arith.maximumf %4, %3 : vector<16x128xf32>
    %6 = vector.broadcast %cst_2 : f32 to vector<16x128xf32>
    %7 = arith.minimumf %6, %5 : vector<16x128xf32>
    %8 = math.log %7 : vector<16x128xf32>
    %cst_3 = arith.constant 0.000000e+00 : f32
    %9 = vector.broadcast %cst_3 : f32 to vector<16x128xf32>
    %10 = arith.subf %9, %8 : vector<16x128xf32>
    %c1_i32 = arith.constant 1 : i32
    %11 = arith.muli %arg0, %c1_i32 : i32
    %12 = arith.addi %11, %arg1 : i32
    %13 = tpu.iota {dimensions = array<i32: 0>} : vector<16x128xi32>
    %14 = tpu.iota {dimensions = array<i32: 1>} : vector<16x128xi32>
    %c16_i32 = arith.constant 16 : i32
    %15 = arith.muli %12, %c16_i32 : i32
    %16 = vector.broadcast %15 : i32 to vector<16x128xi32>
    %17 = arith.addi %16, %13 : vector<16x128xi32>
    %c128_i32 = arith.constant 128 : i32
    %18 = vector.broadcast %c128_i32 : i32 to vector<16x128xi32>
    %19 = arith.muli %17, %18 : vector<16x128xi32>
    %20 = arith.addi %19, %14 : vector<16x128xi32>
    %c2048_i32 = arith.constant 2048 : i32
    %21 = vector.broadcast %c2048_i32 : i32 to vector<16x128xi32>
    %22 = arith.cmpi slt, %20, %21 : vector<16x128xi32>
    %cst_4 = arith.constant 0.000000e+00 : f32
    %23 = vector.broadcast %cst_4 : f32 to vector<16x128xf32>
    %24 = arith.select %22, %10, %23 : vector<16x128xi1>, vector<16x128xf32>
    %25 = vector.shape_cast %24 : vector<16x128xf32> to vector<2x8x128xf32>
    %cst_5 = arith.constant dense<0.000000e+00> : vector<8x128xf32>
    %26 = vector.multi_reduction <add>, %25, %cst_5 [0] : vector<2x8x128xf32> to vector<8x128xf32>
    %c0_6 = arith.constant 0 : index
    %c0_7 = arith.constant 0 : index
    %27 = vector.load %arg3[%c0_6, %c0_7] : memref<8x128xf32, #tpu.memory_space<vmem>>, vector<8x128xf32>
    %28 = arith.addf %27, %26 : vector<8x128xf32>
    %c0_8 = arith.constant 0 : index
    %c0_9 = arith.constant 0 : index
    %29 = vector.load %arg3[%c0_8, %c0_9] : memref<8x128xf32, #tpu.memory_space<vmem>>, vector<8x128xf32>
    tpu.vector_store %arg3[%c0_8, %c0_9], %28 {strides = array<i32>} : memref<8x128xf32, #tpu.memory_space<vmem>>, vector<8x128xf32>,
    return
  }
  func.func @transform_0(%arg0: i32, %arg1: i32) -> (i32, i32) {
    %c1_i32 = arith.constant 1 : i32
    %0 = arith.muli %arg0, %c1_i32 : i32
    %1 = arith.addi %0, %arg1 : i32
    %c0_i32 = arith.constant 0 : i32
    %c0_i32_0 = arith.constant 0 : i32
    return %1, %c0_i32 : i32, i32
  }
  func.func @transform_1(%arg0: i32, %arg1: i32) -> (i32, i32) {
    %c0_i32 = arith.constant 0 : i32
    %c0_i32_0 = arith.constant 0 : i32
    return %arg0, %c0_i32 : i32, i32
  }
}

</mosaic_0001>

<llo_original>
// kernel: tpu_custom_call.1
$region0: #{tpu_custom_call.1}
  #allocation0 [shape = 'u32[]', space=smem, size = 0x4, offset = 0x4, fixed_abs, tag = 'smem constant byte address 0x4 - core index']
  #allocation1 [shape = 'u32[144,128]{1,0:T(1,128)}', space=vmem, size = 0x12000, scoped, tag = 'internal scratch']
  %s0 = inlined_call_operand.hbm [shape: f32[16,128], index: 0, kind: input, shape index: {}]
  %s1 = inlined_call_operand.hbm [shape: f32[8,128], index: 1, kind: output, shape index: {}]
  %s2 = sld [smem:[#allocation0]]
  $region22: #{tpu_custom_call.1} parent=0
    _
  %s4 = ssub.s32 1, %s2
  %s5 = scalar_select 0, %s4, %s2
  $region1: #{tpu_custom_call.1} parent=0
    #allocation2 [shape = 'u8[8192]{0}', space=vmem, size = 0x2000, scoped, tag = 'input window, operand 0, single buffered']
    #allocation3 [shape = 's32[1]{0}', space=sflag, size = 0x4, scoped, tag = 'scoped memory for tpu_custom_call.1']
    #allocation4 [shape = 's32[1]{0}', space=sflag, size = 0x4, scoped, tag = 'scoped memory for tpu_custom_call.1']
    #allocation5 [shape = 'u8[4096]{0}', space=vmem, size = 0x1000, scoped, tag = 'output window, operand 0, single buffered']
    %6 = vsyncpa [#allocation3], 0
    %7 = vsyncpa [#allocation4], 0
    // Predicated region
    $region2: #{tpu_custom_call.1} parent=1 // pred_check
      _
    $region3: #{tpu_custom_call.1} parent=1 // pred_check_branch
      %9 = sbr.rel (0) target = $region5
    $region4: #{tpu_custom_call.1} parent=1 // pred_region
      %s10 = sadd.s32 0, 0
      %s11 = smul.u32 2, %s10
      %s13 = ssub.s32 256, 256
      %14 = vsyncadd [#allocation3], %s13
      %s15 = smul.addr %s11, 128
      %s16 = scalar_lea.hbm %s0, %s15
      %s17 = sshll.u32 [#allocation2], 4
      %s18 = int_to_ptr.vmem [resolvable:$true] %s17
      %23 = dma.hbm_to_vmem [thread:$0]  %s16, 256, %s18, [#allocation3], 128, 128, 8
    $region5: #{tpu_custom_call.1} parent=1 // pred_fallthru
      _
    // Predicated region
    $region6: #{tpu_custom_call.1} parent=1 // pred_check
      _
    $region7: #{tpu_custom_call.1} parent=1 // pred_check_branch
      %25 = sbr.rel (0) target = $region9
    $region8: #{tpu_custom_call.1} parent=1 // pred_region
      %26 = dma.done [#allocation3], 256
    $region9: #{tpu_custom_call.1} parent=1 // pred_fallthru
      _
    %s27 = sadd.s32 0, 0
    %s28 = smul.u32 2, %s27
    %p29 = scmp.eq.s32.totalorder 0, 0
    // Predicated region
    $region10: #{tpu_custom_call.1} parent=1 // pred_check
      %p30 = pneg %p29
    $region11: #{tpu_custom_call.1} parent=1 // pred_check_branch
      %32 = sbr.rel (%p30) target = $region13
    $region12: #{tpu_custom_call.1} parent=1 // pred_region
      %33 = vst [vmem:[#allocation5] sm:$0xff] 0.0
    $region13: #{tpu_custom_call.1} parent=1 // pred_fallthru
      _
    %v34 = vld [vmem:[#allocation2] sm:$0xff]
    %v35 = vld [vmem:[#allocation2 + $0x8] sm:$0xff]
    %v36 = vmax.f32 %v34, 1e-40
    %v37 = vmax.f32 %v35, 1e-40
    %v38 = vmin.f32 %v36, 1.0
    %v39 = vmin.f32 %v37, 1.0
    %v40 = vlog2.pop %v38
    %v41 = vmul.f32 %v40, 0.6931472
    %v42 = vlog2.pop %v39
    %v43 = vmul.f32 %v42, 0.6931472
    %v44 = vsub.f32 0.0, %v41
    %v45 = vsub.f32 0.0, %v43
    %s46 = sadd.s32 0, 0
    %v47 = vlaneseq
    %v48 = vshrl.u32 %v47, 7
    %v49 = vadd.s32 %v48, 8
    %v50 = vlaneseq
    %v51 = vand.u32 %v50, 127
    %s52 = smul.u32 %s46, 16
    %v53 = vstv %s52
    %v54 = vadd.s32 %v53, %v48
    %v55 = vadd.s32 %v53, %v49
    %v56 = vmul.u32 %v54, 128
    %v57 = vmul.u32 %v55, 128
    %v58 = vadd.s32 %v56, %v51
    %v59 = vadd.s32 %v57, %v51
    %vm60 = vcmp.lt.s32.totalorder %v58, 2048
    %vm61 = vcmp.lt.s32.totalorder %v59, 2048
    %v62 = vsel %vm60, %v44, 0.0
    %v63 = vsel %vm61, %v45, 0.0
    %v64 = vadd.f32 %v62, %v63
    %v65 = vld [vmem:[#allocation5] sm:$0xff]
    %v66 = vadd.f32 %v65, %v64
    %67 = vst [vmem:[#allocation5] sm:$0xff] %v66
    // Predicated region
    $region14: #{tpu_custom_call.1} parent=1 // pred_check
      _
    $region15: #{tpu_custom_call.1} parent=1 // pred_check_branch
      %69 = sbr.rel (0) target = $region17
    $region16: #{tpu_custom_call.1} parent=1 // pred_region
      %s71 = ssub.s32 128, 128
      %72 = vsyncadd [#allocation4], %s71
      %s74 = sshll.u32 [#allocation5], 4
      %s75 = int_to_ptr.vmem [resolvable:$true] %s74
      %77 = dma.vmem_to_hbm [thread:$0]  %s75, 128, %s1, [#allocation4]
    $region17: #{tpu_custom_call.1} parent=1 // pred_fallthru
      _
    // Predicated region
    $region18: #{tpu_custom_call.1} parent=1 // pred_check
      _
    $region19: #{tpu_custom_call.1} parent=1 // pred_check_branch
      %79 = sbr.rel (0) target = $region21
    $region20: #{tpu_custom_call.1} parent=1 // pred_region
      %80 = dma.done [#allocation4], 128
    $region21: #{tpu_custom_call.1} parent=1 // pred_fallthru
      _
    %81 = vsyncpa [#allocation3], 1
    %82 = vsyncpa [#allocation4], 1

</llo_original>
